<compile_context>
chip_gen: v5e
topology: v5e:2x2
jax: 0.10.0
libtpu: 0.0.40
codegen_flags: <defaults>
</compile_context>

<pallas_src>
import functools

import jax
import jax.numpy as jnp
from jax import lax
from jax.experimental import pallas as pl
from jax.experimental.pallas import tpu as pltpu

_LANES = 128
_ACC_ROWS = 48            # chunk/accumulator height: multiple of 8 (f32), 16 (bf16), 3 (mod-6)
_MAX_TILE_ROWS = 4608     # 48 * 96; 2.25 MiB per f32 input block (9 MiB double-buffered x2 inputs)


def _accumulate_tile(pred_ref, targ_ref, acc_ref, *, tile_rows, masked,
                     tile_start, rows_valid):
    """acc(48,128) += sum over 48-row chunks of |pred - targ| for this tile."""
    n_chunks = tile_rows // _ACC_ROWS

    def body(k, acc):
        start = pl.multiple_of(k * _ACC_ROWS, _ACC_ROWS)
        p = pred_ref[pl.ds(start, _ACC_ROWS), :].astype(jnp.float32)
        t = targ_ref[pl.ds(start, _ACC_ROWS), :].astype(jnp.float32)
        d = jnp.abs(p - t)
        if masked:
            # Row-bound mask for the (possibly garbage) tail of a partial /
            # out-of-range tile.  Zero-padded in-bounds elements already have
            # |diff| == 0 and need no masking.
            row = lax.broadcasted_iota(jnp.int32, (_ACC_ROWS, _LANES), 0)
            d = jnp.where(tile_start + start + row < rows_valid, d, 0.0)
        return acc + d

    if n_chunks % 8 == 0:
        unroll = 8
    elif n_chunks % 4 == 0:
        unroll = 4
    else:
        unroll = 1

    acc_ref[...] += lax.fori_loop(
        0, n_chunks, body, jnp.zeros((_ACC_ROWS, _LANES), jnp.float32),
        unroll=unroll)


def _posenet_kernel(pred_ref, targ_ref, out_ref, acc_ref, *,
                    tile_rows, rows_valid, inv_denom):
    c = pl.program_id(0)               # core-split axis ("parallel")
    i = pl.program_id(1)               # row-tile axis   ("arbitrary")
    tiles_per_core = pl.num_programs(1)

    @pl.when(i == 0)
    def _init():
        acc_ref[...] = jnp.zeros_like(acc_ref)

    tile_idx = c * tiles_per_core + i          # un-clamped logical tile index
    tile_start = tile_idx * tile_rows
    is_full = tile_start + tile_rows <= rows_valid

    # Steady state: tile entirely inside the valid rows -> plain accumulate.
    @pl.when(is_full)
    def _steady():
        _accumulate_tile(pred_ref, targ_ref, acc_ref, tile_rows=tile_rows,
                         masked=False, tile_start=tile_start,
                         rows_valid=rows_valid)

    # Tail tile (partial) or a duplicated/clamped out-of-range tile.
    @pl.when(jnp.logical_not(is_full))
    def _tail():
        _accumulate_tile(pred_ref, targ_ref, acc_ref, tile_rows=tile_rows,
                         masked=True, tile_start=tile_start,
                         rows_valid=rows_valid)

    @pl.when(i == tiles_per_core - 1)
    def _finalize():
        acc = acc_ref[...]
        # Translation mask on the 48x128 accumulator: (flat % 6) < 3.
        row = lax.broadcasted_iota(jnp.int32, (_ACC_ROWS, _LANES), 0)
        lane = lax.broadcasted_iota(jnp.int32, (_ACC_ROWS, _LANES), 1)
        t_mask = ((row * _LANES + lane) % 6) < 3
        t_sum = jnp.sum(jnp.where(t_mask, acc, 0.0))
        q_sum = jnp.sum(acc) - t_sum
        # Per-core partials packed into a lane-dense (1, 8, 128) output block:
        # sublane 0 -> t partial, sublane 1 -> q partial, rest zero.
        sub = lax.broadcasted_iota(jnp.int32, out_ref.shape, 1)
        out_ref[...] = jnp.where(sub == 0, t_sum * inv_denom,
                                 jnp.where(sub == 1, q_sum * inv_denom, 0.0))


def posenet_criterion(pred, targ, sax, saq, *, tile_rows=None):
    """pred, targ: (N, 6) float32/bfloat16; sax, saq: scalar float32 params."""
    n, d = pred.shape
    assert d == 6, "PoseNetCriterion expects N x 6 inputs"
    assert pred.dtype == targ.dtype
    total = n * d
    rows_needed = -(-total // _LANES)

    if tile_rows is None:
        if rows_needed >= _MAX_TILE_ROWS:
            tile_rows = _MAX_TILE_ROWS
        else:
            tile_rows = ((rows_needed + _ACC_ROWS - 1) // _ACC_ROWS) * _ACC_ROWS
    assert tile_rows % _ACC_ROWS == 0 and tile_rows > 0

    # Pad only to the next 128 multiple (or to one full tile for tiny inputs
    # so the block is never taller than the array).  The partial last tile is
    # masked in-kernel; zero-padded elements are zero in BOTH inputs.
    padded_rows = max(rows_needed, tile_rows)
    num_tiles = -(-padded_rows // tile_rows)
    tiles_per_core = -(-num_tiles // 2)

    flat_pred = pred.reshape(-1)
    flat_targ = targ.reshape(-1)
    pad = padded_rows * _LANES - total
    if pad:
        flat_pred = jnp.pad(flat_pred, (0, pad))
        flat_targ = jnp.pad(flat_targ, (0, pad))
    pred2d = flat_pred.reshape(padded_rows, _LANES)
    targ2d = flat_targ.reshape(padded_rows, _LANES)

    kernel = functools.partial(
        _posenet_kernel, tile_rows=tile_rows, rows_valid=padded_rows,
        inv_denom=1.0 / (n * 3))

    def in_map(ci, ti):
        # Core ci handles tiles [ci*tiles_per_core, (ci+1)*tiles_per_core);
        # clamp the (at most one) out-of-range tile to a valid block index —
        # its contribution is fully masked out in-kernel.
        return (jnp.minimum(ci * tiles_per_core + ti, num_tiles - 1), 0)

    partial = pl.pallas_call(
        kernel,
        out_shape=jax.ShapeDtypeStruct((2, 8, _LANES), jnp.float32),
        grid=(2, tiles_per_core),
        in_specs=[
            pl.BlockSpec((tile_rows, _LANES), in_map),   # pred
            pl.BlockSpec((tile_rows, _LANES), in_map),   # targ
        ],
        out_specs=pl.BlockSpec((1, 8, _LANES), lambda ci, ti: (ci, 0, 0)),
        scratch_shapes=[
            pltpu.VMEM((_ACC_ROWS, _LANES), jnp.float32),  # running |diff| accumulator
        ],
        compiler_params=pltpu.CompilerParams(
            dimension_semantics=("parallel", "arbitrary"),
            vmem_limit_bytes=32 * 1024 * 1024),
    )(pred2d, targ2d)

    sax = jnp.asarray(sax, jnp.float32)
    saq = jnp.asarray(saq, jnp.float32)
    t_loss = partial[0, 0, 0] + partial[1, 0, 0]
    q_loss = partial[0, 1, 0] + partial[1, 1, 0]
    return jnp.exp(-sax) * t_loss + sax + jnp.exp(-saq) * q_loss + saq


def posenet_criterion_ref(pred, targ, sax, saq):
    t = jnp.mean(jnp.abs(pred[:, :3] - targ[:, :3]))
    q = jnp.mean(jnp.abs(pred[:, 3:] - targ[:, 3:]))
    return jnp.exp(-sax) * t + sax + jnp.exp(-saq) * q + saq


if __name__ == "__main__":
    # Deterministic parameter init (matches nn.Parameter(torch.Tensor([s]))).
    sax = jnp.float32(0.0)
    saq = jnp.float32(-3.0)

    key = jax.random.PRNGKey(0)
    k1, k2, k3, k4, k5, k6 = jax.random.split(key, 6)

    # 1) Small single-tile case (default tiling).
    N = 8
    pred = jax.random.normal(k1, (N, 6), dtype=jnp.float32)
    targ = jax.random.normal(k2, (N, 6), dtype=jnp.float32)
    loss = jax.block_until_ready(posenet_criterion(pred, targ, sax, saq))
    ref = jax.block_until_ready(posenet_criterion_ref(pred, targ, sax, saq))
    assert jnp.allclose(loss, ref, rtol=1e-5, atol=1e-5), (loss, ref)

    # 2) Multi-tile, dual-core split with an ODD tile count (exercises the
    #    clamped duplicate tile), partial last tile and element zero-padding.
    N2 = 3000
    pred2 = jax.random.normal(k3, (N2, 6), dtype=jnp.float32)
    targ2 = jax.random.normal(k4, (N2, 6), dtype=jnp.float32)
    loss2 = jax.block_until_ready(
        posenet_criterion(pred2, targ2, sax, saq, tile_rows=48))
    ref2 = jax.block_until_ready(posenet_criterion_ref(pred2, targ2, sax, saq))
    assert jnp.allclose(loss2, ref2, rtol=1e-4, atol=1e-5), (loss2, ref2)

    # 3) bf16 inputs (48-row packing path), default tiling.
    N3 = 256
    pred3 = jax.random.normal(k5, (N3, 6), dtype=jnp.float32).astype(jnp.bfloat16)
    targ3 = jax.random.normal(k6, (N3, 6), dtype=jnp.float32).astype(jnp.bfloat16)
    loss3 = jax.block_until_ready(posenet_criterion(pred3, targ3, sax, saq))
    ref3 = jax.block_until_ready(
        posenet_criterion_ref(pred3.astype(jnp.float32),
                              targ3.astype(jnp.float32), sax, saq))
    assert jnp.allclose(loss3, ref3, rtol=1e-4, atol=1e-4), (loss3, ref3)

    print("KERNEL_OK")
</pallas_src>

<mosaic_0001>
module attributes {stable_mosaic.version = 11 : i64} {
  func.func @_posenet_kernel(%arg0: i32, %arg1: i32, %arg2: memref<48x128xf32, #tpu.memory_space<vmem>>, %arg3: memref<48x128xf32, #tpu.memory_space<vmem>>, %arg4: memref<1x8x128xf32, #tpu.memory_space<vmem>>, %arg5: memref<48x128xf32, #tpu.memory_space<vmem>>) attributes {dimension_semantics = [#tpu.dimension_semantics<parallel>, #tpu.dimension_semantics<arbitrary>], iteration_bounds = array<i64: 2, 1>, scalar_prefetch = 0 : i64, scratch_operands = 1 : i64, tpu.core_type = #tpu.core_type<tc>, window_params = [{transform_indices = @transform_0, window_bounds = array<i64: 48, 128>}, {transform_indices = @transform_1, window_bounds = array<i64: 48, 128>}, {transform_indices = @transform_2, window_bounds = array<i64: 1, 8, 128>}]} {
    %c0_i32 = arith.constant 0 : i32
    %0 = arith.cmpi eq, %arg1, %c0_i32 : i32
    %1 = arith.extui %0 : i1 to i32
    %c0_i32_0 = arith.constant 0 : i32
    %2 = arith.cmpi ne, %1, %c0_i32_0 : i32
    scf.if %2 {
      %cst = arith.constant 0.000000e+00 : f32
      %16 = vector.broadcast %cst : f32 to vector<48x128xf32>
      %c0 = arith.constant 0 : index
      %c0_7 = arith.constant 0 : index
      %17 = vector.load %arg5[%c0, %c0_7] : memref<48x128xf32, #tpu.memory_space<vmem>>, vector<48x128xf32>
      tpu.vector_store %arg5[%c0, %c0_7], %16 {strides = array<i32>} : memref<48x128xf32, #tpu.memory_space<vmem>>, vector<48x128xf32>,
    } else {
    }
    %c1_i32 = arith.constant 1 : i32
    %3 = arith.muli %arg0, %c1_i32 : i32
    %4 = arith.addi %3, %arg1 : i32
    %c48_i32 = arith.constant 48 : i32
    %5 = arith.muli %4, %c48_i32 : i32
    %c48_i32_1 = arith.constant 48 : i32
    %6 = arith.addi %5, %c48_i32_1 : i32
    %c48_i32_2 = arith.constant 48 : i32
    %7 = arith.cmpi sle, %6, %c48_i32_2 : i32
    %8 = arith.extui %7 : i1 to i32
    %c0_i32_3 = arith.constant 0 : i32
    %9 = arith.cmpi ne, %8, %c0_i32_3 : i32
    scf.if %9 {
      %c0 = arith.constant 0 : index
      %c0_7 = arith.constant 0 : index
      %16 = vector.load %arg5[%c0, %c0_7] : memref<48x128xf32, #tpu.memory_space<vmem>>, vector<48x128xf32>
      %cst = arith.constant 0.000000e+00 : f32
      %17 = vector.broadcast %cst : f32 to vector<48x128xf32>
      %c0_i32_8 = arith.constant 0 : i32
      %c48_i32_9 = arith.constant 48 : i32
      %18 = arith.muli %c0_i32_8, %c48_i32_9 : i32
      %19 = tpu.assume_multiple %18, 48 : i32
      %20 = arith.index_cast %19 : i32 to index
      %c0_10 = arith.constant 0 : index
      %21 = vector.load %arg2[%20, %c0_10] : memref<48x128xf32, #tpu.memory_space<vmem>>, vector<48x128xf32>
      %22 = arith.index_cast %19 : i32 to index
      %c0_11 = arith.constant 0 : index
      %23 = vector.load %arg3[%22, %c0_11] : memref<48x128xf32, #tpu.memory_space<vmem>>, vector<48x128xf32>
      %24 = arith.subf %21, %23 : vector<48x128xf32>
      %25 = math.absf %24 : vector<48x128xf32>
      %26 = arith.addf %17, %25 : vector<48x128xf32>
      %c1_i32_12 = arith.constant 1 : i32
      %27 = arith.addf %16, %26 : vector<48x128xf32>
      %c0_13 = arith.constant 0 : index
      %c0_14 = arith.constant 0 : index
      %28 = vector.load %arg5[%c0_13, %c0_14] : memref<48x128xf32, #tpu.memory_space<vmem>>, vector<48x128xf32>
      tpu.vector_store %arg5[%c0_13, %c0_14], %27 {strides = array<i32>} : memref<48x128xf32, #tpu.memory_space<vmem>>, vector<48x128xf32>,
    } else {
    }
    %true = arith.constant true
    %10 = arith.xori %7, %true : i1
    %11 = arith.extui %10 : i1 to i32
    %c0_i32_4 = arith.constant 0 : i32
    %12 = arith.cmpi ne, %11, %c0_i32_4 : i32
    scf.if %12 {
      %c0 = arith.constant 0 : index
      %c0_7 = arith.constant 0 : index
      %16 = vector.load %arg5[%c0, %c0_7] : memref<48x128xf32, #tpu.memory_space<vmem>>, vector<48x128xf32>
      %cst = arith.constant 0.000000e+00 : f32
      %17 = vector.broadcast %cst : f32 to vector<48x128xf32>
      %c0_i32_8 = arith.constant 0 : i32
      %c48_i32_9 = arith.constant 48 : i32
      %18 = arith.muli %c0_i32_8, %c48_i32_9 : i32
      %19 = tpu.assume_multiple %18, 48 : i32
      %20 = arith.index_cast %19 : i32 to index
      %c0_10 = arith.constant 0 : index
      %21 = vector.load %arg2[%20, %c0_10] : memref<48x128xf32, #tpu.memory_space<vmem>>, vector<48x128xf32>
      %22 = arith.index_cast %19 : i32 to index
      %c0_11 = arith.constant 0 : index
      %23 = vector.load %arg3[%22, %c0_11] : memref<48x128xf32, #tpu.memory_space<vmem>>, vector<48x128xf32>
      %24 = arith.subf %21, %23 : vector<48x128xf32>
      %25 = math.absf %24 : vector<48x128xf32>
      %26 = tpu.iota {dimensions = array<i32: 0>} : vector<48x128xi32>
      %27 = arith.addi %5, %19 : i32
      %28 = vector.broadcast %27 : i32 to vector<48x128xi32>
      %29 = arith.addi %28, %26 : vector<48x128xi32>
      %c48_i32_12 = arith.constant 48 : i32
      %30 = vector.broadcast %c48_i32_12 : i32 to vector<48x128xi32>
      %31 = arith.cmpi slt, %29, %30 : vector<48x128xi32>
      %cst_13 = arith.constant 0.000000e+00 : f32
      %32 = vector.broadcast %cst_13 : f32 to vector<48x128xf32>
      %33 = arith.select %31, %25, %32 : vector<48x128xi1>, vector<48x128xf32>
      %34 = arith.addf %17, %33 : vector<48x128xf32>
      %c1_i32_14 = arith.constant 1 : i32
      %35 = arith.addf %16, %34 : vector<48x128xf32>
      %c0_15 = arith.constant 0 : index
      %c0_16 = arith.constant 0 : index
      %36 = vector.load %arg5[%c0_15, %c0_16] : memref<48x128xf32, #tpu.memory_space<vmem>>, vector<48x128xf32>
      tpu.vector_store %arg5[%c0_15, %c0_16], %35 {strides = array<i32>} : memref<48x128xf32, #tpu.memory_space<vmem>>, vector<48x128xf32>,
    } else {
    }
    %c0_i32_5 = arith.constant 0 : i32
    %13 = arith.cmpi eq, %arg1, %c0_i32_5 : i32
    %14 = arith.extui %13 : i1 to i32
    %c0_i32_6 = arith.constant 0 : i32
    %15 = arith.cmpi ne, %14, %c0_i32_6 : i32
    scf.if %15 {
      %c0 = arith.constant 0 : index
      %c0_7 = arith.constant 0 : index
      %16 = vector.load %arg5[%c0, %c0_7] : memref<48x128xf32, #tpu.memory_space<vmem>>, vector<48x128xf32>
      %17 = tpu.iota {dimensions = array<i32: 0>} : vector<48x128xi32>
      %18 = tpu.iota {dimensions = array<i32: 1>} : vector<48x128xi32>
      %c128_i32 = arith.constant 128 : i32
      %19 = vector.broadcast %c128_i32 : i32 to vector<48x128xi32>
      %20 = arith.muli %17, %19 : vector<48x128xi32>
      %21 = arith.addi %20, %18 : vector<48x128xi32>
      %c6_i32 = arith.constant 6 : i32
      %c0_i32_8 = arith.constant 0 : i32
      %22 = arith.cmpi eq, %c6_i32, %c0_i32_8 : i32
      %c1_i32_9 = arith.constant 1 : i32
      %23 = arith.select %22, %c1_i32_9, %c6_i32 : i32
      %24 = vector.broadcast %23 : i32 to vector<48x128xi32>
      %25 = arith.remsi %21, %24 : vector<48x128xi32>
      %c0_i32_10 = arith.constant 0 : i32
      %26 = vector.broadcast %c0_i32_10 : i32 to vector<48x128xi32>
      %27 = arith.cmpi ne, %25, %26 : vector<48x128xi32>
      %c0_i32_11 = arith.constant 0 : i32
      %28 = vector.broadcast %c0_i32_11 : i32 to vector<48x128xi32>
      %29 = arith.cmpi slt, %25, %28 : vector<48x128xi32>
      %c0_i32_12 = arith.constant 0 : i32
      %30 = arith.cmpi slt, %23, %c0_i32_12 : i32
      %31 = vector.broadcast %30 : i1 to vector<48x128xi1>
      %32 = vector.broadcast %31 : vector<48x128xi1> to vector<48x128xi1>
      %33 = arith.xori %29, %32 : vector<48x128xi1>
      %34 = arith.andi %33, %27 : vector<48x128xi1>
      %35 = vector.broadcast %23 : i32 to vector<48x128xi32>
      %36 = arith.addi %25, %35 : vector<48x128xi32>
      %37 = arith.select %34, %36, %25 : vector<48x128xi1>, vector<48x128xi32>
      %c3_i32 = arith.constant 3 : i32
      %38 = vector.broadcast %c3_i32 : i32 to vector<48x128xi32>
      %39 = arith.cmpi slt, %37, %38 : vector<48x128xi32>
      %cst = arith.constant 0.000000e+00 : f32
      %40 = vector.broadcast %cst : f32 to vector<48x128xf32>
      %41 = arith.select %39, %16, %40 : vector<48x128xi1>, vector<48x128xf32>
      %42 = vector.shape_cast %41 : vector<48x128xf32> to vector<1x48x128xf32>
      %cst_13 = arith.constant dense<0.000000e+00> : vector<1xf32>
      %43 = vector.multi_reduction <add>, %42, %cst_13 [1, 2] : vector<1x48x128xf32> to vector<1xf32>
      %44 = vector.shape_cast %43 : vector<1xf32> to vector<1x1x1xf32>
      %45 = vector.extract %44[0, 0, 0] : f32 from vector<1x1x1xf32>
      %46 = vector.shape_cast %16 : vector<48x128xf32> to vector<1x48x128xf32>
      %cst_14 = arith.constant dense<0.000000e+00> : vector<1xf32>
      %47 = vector.multi_reduction <add>, %46, %cst_14 [1, 2] : vector<1x48x128xf32> to vector<1xf32>
      %48 = vector.shape_cast %47 : vector<1xf32> to vector<1x1x1xf32>
      %49 = vector.extract %48[0, 0, 0] : f32 from vector<1x1x1xf32>
      %50 = arith.subf %49, %45 : f32
      %51 = tpu.iota {dimensions = array<i32: 1>} : vector<1x8x128xi32>
      %c0_i32_15 = arith.constant 0 : i32
      %52 = vector.broadcast %c0_i32_15 : i32 to vector<1x8x128xi32>
      %53 = arith.cmpi eq, %51, %52 : vector<1x8x128xi32>
      %cst_16 = arith.constant 0.0416666679 : f32
      %54 = arith.mulf %45, %cst_16 : f32
      %c1_i32_17 = arith.constant 1 : i32
      %55 = vector.broadcast %c1_i32_17 : i32 to vector<1x8x128xi32>
      %56 = arith.cmpi eq, %51, %55 : vector<1x8x128xi32>
      %cst_18 = arith.constant 0.0416666679 : f32
      %57 = arith.mulf %50, %cst_18 : f32
      %cst_19 = arith.constant 0.000000e+00 : f32
      %58 = vector.broadcast %57 : f32 to vector<1x8x128xf32>
      %59 = vector.broadcast %cst_19 : f32 to vector<1x8x128xf32>
      %60 = arith.select %56, %58, %59 : vector<1x8x128xi1>, vector<1x8x128xf32>
      %61 = vector.broadcast %54 : f32 to vector<1x8x128xf32>
      %62 = arith.select %53, %61, %60 : vector<1x8x128xi1>, vector<1x8x128xf32>
      %c0_20 = arith.constant 0 : index
      %c0_21 = arith.constant 0 : index
      %c0_22 = arith.constant 0 : index
      %63 = vector.load %arg4[%c0_20, %c0_21, %c0_22] : memref<1x8x128xf32, #tpu.memory_space<vmem>>, vector<1x8x128xf32>
      tpu.vector_store %arg4[%c0_20, %c0_21, %c0_22], %62 {strides = array<i32>} : memref<1x8x128xf32, #tpu.memory_space<vmem>>, vector<1x8x128xf32>,
    } else {
    }
    return
  }
  func.func @transform_0(%arg0: i32, %arg1: i32) -> (i32, i32) {
    %c1_i32 = arith.constant 1 : i32
    %0 = arith.muli %arg0, %c1_i32 : i32
    %1 = arith.addi %0, %arg1 : i32
    %c0_i32 = arith.constant 0 : i32
    %2 = arith.minsi %1, %c0_i32 : i32
    %c0_i32_0 = arith.constant 0 : i32
    %c0_i32_1 = arith.constant 0 : i32
    return %2, %c0_i32_0 : i32, i32
  }
  func.func @transform_1(%arg0: i32, %arg1: i32) -> (i32, i32) {
    %c1_i32 = arith.constant 1 : i32
    %0 = arith.muli %arg0, %c1_i32 : i32
    %1 = arith.addi %0, %arg1 : i32
    %c0_i32 = arith.constant 0 : i32
    %2 = arith.minsi %1, %c0_i32 : i32
    %c0_i32_0 = arith.constant 0 : i32
    %c0_i32_1 = arith.constant 0 : i32
    return %2, %c0_i32_0 : i32, i32
  }
  func.func @transform_2(%arg0: i32, %arg1: i32) -> (i32, i32, i32) {
    %c0_i32 = arith.constant 0 : i32
    %c0_i32_0 = arith.constant 0 : i32
    %c0_i32_1 = arith.constant 0 : i32
    return %arg0, %c0_i32, %c0_i32_0 : i32, i32, i32
  }
}

</mosaic_0001>

<llo_original>
// kernel: tpu_custom_call.1
$region0: #{tpu_custom_call.1}
  #allocation0 [shape = 'u32[]', space=smem, size = 0x4, offset = 0x4, fixed_abs, tag = 'smem constant byte address 0x4 - core index']
  #allocation1 [shape = 'u32[72,128]{1,0:T(1,128)}', space=vmem, size = 0x9000, scoped, tag = 'internal scratch']
  #allocation2 [shape = 'f32[48,128]{1,0:T(8,128)}', space=vmem, size = 0x6000, scoped, tag = 'scratch operand']
  %s0 = inlined_call_operand.hbm [shape: f32[48,128], index: 0, kind: input, shape index: {}]
  %s1 = inlined_call_operand.hbm [shape: f32[48,128], index: 1, kind: input, shape index: {}]
  %s2 = inlined_call_operand.hbm [shape: f32[2,8,128], index: 2, kind: output, shape index: {}]
  %s3 = sld [smem:[#allocation0]]
  $region65: #{tpu_custom_call.1} parent=0
    _
  %s5 = ssub.s32 1, %s3
  %s6 = scalar_select 0, %s5, %s3
  $region1: #{tpu_custom_call.1} parent=0
    #allocation3 [shape = 'u8[49152]{0}', space=vmem, size = 0xc000, scoped, tag = 'input window, operand 0']
    #allocation4 [shape = 's32[2]{0}', space=sflag, size = 0x8, scoped, tag = 'scoped memory for tpu_custom_call.1']
    #allocation5 [shape = 's32[2]{0}', space=sflag, size = 0x8, scoped, tag = 'scoped memory for tpu_custom_call.1']
    #allocation6 [shape = 'u8[49152]{0}', space=vmem, size = 0xc000, scoped, tag = 'input window, operand 1']
    #allocation7 [shape = 's32[2]{0}', space=sflag, size = 0x8, scoped, tag = 'scoped memory for tpu_custom_call.1']
    #allocation8 [shape = 'u8[8192]{0}', space=vmem, size = 0x2000, scoped, tag = 'output window, operand 0']
    %7 = vsyncpa [#allocation4], 0
    %s8 = scalar_lea.sflag [#allocation4], 1
    %9 = vsyncpa %s8, 0
    %10 = vsyncpa [#allocation7], 0
    %s11 = scalar_lea.sflag [#allocation7], 1
    %12 = vsyncpa %s11, 0
    %13 = vsyncpa [#allocation5], 0
    %s14 = scalar_lea.sflag [#allocation5], 1
    %15 = vsyncpa %s14, 0
    loop: start=0, step=1, limit=4
    $region2: #{tpu_custom_call.1} parent=1 // loop_pre_header
      _
    $region3: #{tpu_custom_call.1} parent=1 // loop_header
      %s17 = sphi 0, %s21
      %p18 = scmp.ge.s32.totalorder %s17, 4
      %s24 = sphi 0, %s36
      %s25 = sphi 0, %s32
      %s26 = sphi 0, %s24
      %s27 = sphi 0, %s25
      %s28 = sphi 0, %s26
      %s29 = sphi 0, %s27
      %s45 = sphi 0, %s47
      %s48 = sphi 0, %s45
      %s49 = sphi 0, %s48
      %s65 = sphi 0, %s49
      %s77 = sphi 0, %s79
      %s80 = sphi 0, %s77
      %s81 = sphi 0, %s80
      %s97 = sphi 0, %s81
      %s103 = sphi 0, %s105
      %s106 = sphi 0, %s103
      %s107 = sphi 0, %s106
      %s123 = sphi 0, %s107
    $region4: #{tpu_custom_call.1} parent=1 // loop_header_branch
      %20 = sbr.rel (%p18) target = $region8
    $region5: #{tpu_custom_call.1} parent=1 // loop_body
      %s22 = ssub.s32 %s17, 1
      %s23 = ssub.s32 %s17, 2
      %s30 = sadd.s32 1, %s25
      %p31 = scmp.ge.s32.totalorder %s30, 1
      %s32 = scalar_select %p31, 0, %s30
      %s33 = sadd.s32 1, %s24
      %s34 = scalar_select %p31, %s33, %s24
      %p35 = scmp.ge.s32.totalorder %s34, 2
      %s36 = scalar_select %p35, 0, %s34
      %s37 = sadd.s32 %s24, %s25
      %p38 = scmp.lt.s32.totalorder %s37, 0
      %s39 = scalar_select %p38, %s37, 0
      %s40 = sadd.s32 %s36, %s32
      %p41 = scmp.lt.s32.totalorder %s40, 0
      %s42 = scalar_select %p41, %s40, 0
      %s43 = ssub.s32 %s39, %s42
      %p44 = scmp.eq.s32.totalorder %s43, 0
      %s46 = sadd.s32 %s45, 1
      %s47 = scalar_select %p44, %s45, %s46
      %p50 = pneg %p44
      %p51 = scmp.eq.s32.totalorder %s17, 1
      %p52 = por %p50, %p51
      %p53 = scmp.ne.s32.totalorder %s45, %s48
      %p54 = scmp.eq.s32.totalorder %s17, 0
      %p55 = por %p53, %p54
      %p56 = scmp.ne.s32.totalorder %s45, %s48
      %p57 = scmp.eq.s32.totalorder %s22, 1
      %p58 = por %p56, %p57
      %p59 = scmp.ne.s32.totalorder %s48, %s49
      %p60 = scmp.eq.s32.totalorder %s22, 0
      %p61 = por %p59, %p60
      %p62 = scmp.ne.s32.totalorder %s48, %s49
      %p63 = scmp.eq.s32.totalorder %s23, 1
      %p64 = por %p62, %p63
      %p66 = scmp.ne.s32.totalorder %s49, %s65
      %p67 = scmp.eq.s32.totalorder %s23, 0
      %p68 = por %p66, %p67
      %s69 = sadd.s32 %s24, %s25
      %p70 = scmp.lt.s32.totalorder %s69, 0
      %s71 = scalar_select %p70, %s69, 0
      %s72 = sadd.s32 %s36, %s32
      %p73 = scmp.lt.s32.totalorder %s72, 0
      %s74 = scalar_select %p73, %s72, 0
      %s75 = ssub.s32 %s71, %s74
      %p76 = scmp.eq.s32.totalorder %s75, 0
      %s78 = sadd.s32 %s77, 1
      %s79 = scalar_select %p76, %s77, %s78
      %p82 = pneg %p76
      %p83 = scmp.eq.s32.totalorder %s17, 1
      %p84 = por %p82, %p83
      %p85 = scmp.ne.s32.totalorder %s77, %s80
      %p86 = scmp.eq.s32.totalorder %s17, 0
      %p87 = por %p85, %p86
      %p88 = scmp.ne.s32.totalorder %s77, %s80
      %p89 = scmp.eq.s32.totalorder %s22, 1
      %p90 = por %p88, %p89
      %p91 = scmp.ne.s32.totalorder %s80, %s81
      %p92 = scmp.eq.s32.totalorder %s22, 0
      %p93 = por %p91, %p92
      %p94 = scmp.ne.s32.totalorder %s80, %s81
      %p95 = scmp.eq.s32.totalorder %s23, 1
      %p96 = por %p94, %p95
      %p98 = scmp.ne.s32.totalorder %s81, %s97
      %p99 = scmp.eq.s32.totalorder %s23, 0
      %p100 = por %p98, %p99
      %s101 = ssub.s32 %s24, %s36
      %p102 = scmp.eq.s32.totalorder %s101, 0
      %s104 = sadd.s32 %s103, 1
      %s105 = scalar_select %p102, %s103, %s104
      %p108 = pneg %p102
      %p109 = scmp.eq.s32.totalorder %s17, 1
      %p110 = por %p108, %p109
      %p111 = scmp.ne.s32.totalorder %s103, %s106
      %p112 = scmp.eq.s32.totalorder %s17, 0
      %p113 = por %p111, %p112
      %p114 = scmp.ne.s32.totalorder %s103, %s106
      %p115 = scmp.eq.s32.totalorder %s22, 1
      %p116 = por %p114, %p115
      %p117 = scmp.ne.s32.totalorder %s106, %s107
      %p118 = scmp.eq.s32.totalorder %s22, 0
      %p119 = por %p117, %p118
      %p120 = scmp.ne.s32.totalorder %s106, %s107
      %p121 = scmp.eq.s32.totalorder %s23, 1
      %p122 = por %p120, %p121
      %p124 = scmp.ne.s32.totalorder %s107, %s123
      %p125 = scmp.eq.s32.totalorder %s23, 0
      %p126 = por %p124, %p125
      %p127 = scmp.le.s32.totalorder 1, %s17
      %p128 = scmp.lt.s32.totalorder %s17, 3
      %p129 = pnand %p127, %p128
      %p130 = pneg %p129
      // Predicated region
      $region9: #{tpu_custom_call.1} parent=5 // pred_check
        _
      $region10: #{tpu_custom_call.1} parent=5 // pred_check_branch
        %132 = sbr.rel (%p129) target = $region12
      $region11: #{tpu_custom_call.1} parent=5 // pred_region
        %s133 = ssub.s32 %s17, 1
      $region12: #{tpu_custom_call.1} parent=5 // pred_fallthru
        _
      %p134 = scmp.lt.s32.totalorder %s17, 2
      // Predicated region
      $region13: #{tpu_custom_call.1} parent=5 // pred_check
        %p135 = pneg %p134
      $region14: #{tpu_custom_call.1} parent=5 // pred_check_branch
        %137 = sbr.rel (%p135) target = $region16
      $region15: #{tpu_custom_call.1} parent=5 // pred_region
        // Predicated region
        $region17: #{tpu_custom_call.1} parent=15 // pred_check
          %p138 = pneg %p55
        $region18: #{tpu_custom_call.1} parent=15 // pred_check_branch
          %140 = sbr.rel (%p138) target = $region20
        $region19: #{tpu_custom_call.1} parent=15 // pred_region
          %s141 = sand.u32 %s45, 1
          %s142 = scalar_lea.sflag [#allocation4], %s141
          %s143 = sand.u32 %s45, 1
          %s144 = smul.addr %s143, 48
          %s145 = scalar_lea.vmem [#allocation3], %s144
          %s146 = sadd.s32 %s24, %s25
          %p147 = scmp.lt.s32.totalorder %s146, 0
          %s148 = scalar_select %p147, %s146, 0
          %s149 = smul.u32 6, %s148
          %151 = vsyncadd %s142, 0
          %s152 = smul.addr %s149, 8
          %s153 = scalar_lea.hbm %s0, %s152
          %s154 = sshll.u32 %s153, 4
          %s155 = int_to_ptr.hbm [resolvable:$true] %s154
          %s156 = sshll.u32 %s145, 4
          %s157 = int_to_ptr.vmem [resolvable:$true] %s156
          %162 = dma.hbm_to_vmem [thread:$0]  %s155, 768, %s157, %s142, 128, 128, 8
        $region20: #{tpu_custom_call.1} parent=15 // pred_fallthru
          _
        // Predicated region
        $region21: #{tpu_custom_call.1} parent=15 // pred_check
          %p163 = pneg %p87
        $region22: #{tpu_custom_call.1} parent=15 // pred_check_branch
          %165 = sbr.rel (%p163) target = $region24
        $region23: #{tpu_custom_call.1} parent=15 // pred_region
          %s166 = sand.u32 %s77, 1
          %s167 = scalar_lea.sflag [#allocation7], %s166
          %s168 = sand.u32 %s77, 1
          %s169 = smul.addr %s168, 48
          %s170 = scalar_lea.vmem [#allocation6], %s169
          %s171 = sadd.s32 %s24, %s25
          %p172 = scmp.lt.s32.totalorder %s171, 0
          %s173 = scalar_select %p172, %s171, 0
          %s174 = smul.u32 6, %s173
          %176 = vsyncadd %s167, 0
          %s177 = smul.addr %s174, 8
          %s178 = scalar_lea.hbm %s1, %s177
          %s179 = sshll.u32 %s178, 4
          %s180 = int_to_ptr.hbm [resolvable:$true] %s179
          %s181 = sshll.u32 %s170, 4
          %s182 = int_to_ptr.vmem [resolvable:$true] %s181
          %187 = dma.hbm_to_vmem [thread:$0]  %s180, 768, %s182, %s167, 128, 128, 8
        $region24: #{tpu_custom_call.1} parent=15 // pred_fallthru
          _
      $region16: #{tpu_custom_call.1} parent=5 // pred_fallthru
        _
      %p188 = scmp.le.s32.totalorder 1, %s17
      %p189 = scmp.lt.s32.totalorder %s17, 3
      %p190 = pnand %p188, %p189
      %p191 = pneg %p190
      // Predicated region
      $region25: #{tpu_custom_call.1} parent=5 // pred_check
        _
      $region26: #{tpu_custom_call.1} parent=5 // pred_check_branch
        %193 = sbr.rel (%p190) target = $region28
      $region27: #{tpu_custom_call.1} parent=5 // pred_region
        %s194 = ssub.s32 %s17, 1
        %s195 = sand.u32 %s48, 1
        %s196 = scalar_lea.sflag [#allocation4], %s195
        %s197 = sand.u32 %s48, 1
        %s198 = smul.addr %s197, 48
        %s199 = scalar_lea.vmem [#allocation3], %s198
        // Predicated region
        $region29: #{tpu_custom_call.1} parent=27 // pred_check
          %p200 = pneg %p61
        $region30: #{tpu_custom_call.1} parent=27 // pred_check_branch
          %202 = sbr.rel (%p200) target = $region32
        $region31: #{tpu_custom_call.1} parent=27 // pred_region
          %204 = dma.done %s196, 768
        $region32: #{tpu_custom_call.1} parent=27 // pred_fallthru
          _
        %s205 = sand.u32 %s80, 1
        %s206 = scalar_lea.sflag [#allocation7], %s205
        %s207 = sand.u32 %s80, 1
        %s208 = smul.addr %s207, 48
        %s209 = scalar_lea.vmem [#allocation6], %s208
        // Predicated region
        $region33: #{tpu_custom_call.1} parent=27 // pred_check
          %p210 = pneg %p93
        $region34: #{tpu_custom_call.1} parent=27 // pred_check_branch
          %212 = sbr.rel (%p210) target = $region36
        $region35: #{tpu_custom_call.1} parent=27 // pred_region
          %214 = dma.done %s206, 768
        $region36: #{tpu_custom_call.1} parent=27 // pred_fallthru
          _
        %s215 = sand.u32 %s48, 1
        %s216 = scalar_lea.sflag [#allocation4], %s215
        %s217 = sand.u32 %s48, 1
        %s218 = smul.addr %s217, 48
        %s219 = scalar_lea.vmem [#allocation3], %s218
        %p220 = pneg %p61
        %p221 = pneg %p58
        %s222 = sand.u32 %s80, 1
        %s223 = scalar_lea.sflag [#allocation7], %s222
        %s224 = sand.u32 %s80, 1
        %s225 = smul.addr %s224, 48
        %s226 = scalar_lea.vmem [#allocation6], %s225
        %p227 = pneg %p93
        %p228 = pneg %p90
        %p229 = pneg %p119
        %p230 = pneg %p116
        %s231 = sand.u32 %s106, 1
        %s232 = scalar_lea.sflag [#allocation5], %s231
        %s233 = sand.u32 %s106, 1
        %s234 = smul.addr %s233, 8
        %s235 = scalar_lea.vmem [#allocation8], %s234
        %s236 = sadd.s32 %s26, %s27
        %p237 = scmp.lt.s32.totalorder %s236, 0
        %s238 = scalar_select %p237, %s236, 0
        %s239 = smul.u32 6, %s238
        %s240 = sadd.s32 %s26, %s27
        %p241 = scmp.lt.s32.totalorder %s240, 0
        %s242 = scalar_select %p241, %s240, 0
        %s243 = smul.u32 6, %s242
        %p244 = scmp.eq.s32.totalorder %s27, 0
        // Predicated region
        $region37: #{tpu_custom_call.1} parent=27 // pred_check
          %p245 = pneg %p244
        $region38: #{tpu_custom_call.1} parent=27 // pred_check_branch
          %247 = sbr.rel (%p245) target = $region40
        $region39: #{tpu_custom_call.1} parent=27 // pred_region
          %248 = vst [vmem:[#allocation2] sm:$0xff] 0.0
          %249 = vst [vmem:[#allocation2 + $0x8] sm:$0xff] 0.0
          %250 = vst [vmem:[#allocation2 + $0x10] sm:$0xff] 0.0
          %251 = vst [vmem:[#allocation2 + $0x18] sm:$0xff] 0.0
          %252 = vst [vmem:[#allocation2 + $0x20] sm:$0xff] 0.0
          %253 = vst [vmem:[#allocation2 + $0x28] sm:$0xff] 0.0
        $region40: #{tpu_custom_call.1} parent=27 // pred_fallthru
          _
        %s254 = sadd.s32 %s26, %s27
        %s255 = smul.u32 %s254, 48
        %s256 = sadd.s32 %s255, 48
        %p257 = scmp.le.s32.totalorder %s256, 48
        // Predicated region
        $region41: #{tpu_custom_call.1} parent=27 // pred_check
          %p258 = pneg %p257
        $region42: #{tpu_custom_call.1} parent=27 // pred_check_branch
          %260 = sbr.rel (%p258) target = $region44
        $region43: #{tpu_custom_call.1} parent=27 // pred_region
          %v261 = vld [vmem:[#allocation2] sm:$0xff]
          %v262 = vld [vmem:[#allocation2 + $0x8] sm:$0xff]
          %v263 = vld [vmem:[#allocation2 + $0x10] sm:$0xff]
          %v264 = vld [vmem:[#allocation2 + $0x18] sm:$0xff]
          %v265 = vld [vmem:[#allocation2 + $0x20] sm:$0xff]
          %v266 = vld [vmem:[#allocation2 + $0x28] sm:$0xff]
          %v267 = vld [vmem:[%s199] sm:$0xff]
          %v268 = vld [vmem:[%s199 + $0x8] sm:$0xff]
          %v269 = vld [vmem:[%s199 + $0x10] sm:$0xff]
          %v270 = vld [vmem:[%s199 + $0x18] sm:$0xff]
          %v271 = vld [vmem:[%s199 + $0x20] sm:$0xff]
          %v272 = vld [vmem:[%s199 + $0x28] sm:$0xff]
          %v273 = vld [vmem:[%s209] sm:$0xff]
          %v274 = vld [vmem:[%s209 + $0x8] sm:$0xff]
          %v275 = vld [vmem:[%s209 + $0x10] sm:$0xff]
          %v276 = vld [vmem:[%s209 + $0x18] sm:$0xff]
          %v277 = vld [vmem:[%s209 + $0x20] sm:$0xff]
          %v278 = vld [vmem:[%s209 + $0x28] sm:$0xff]
          %v279 = vsub.f32 %v267, %v273
          %v280 = vsub.f32 %v268, %v274
          %v281 = vsub.f32 %v269, %v275
          %v282 = vsub.f32 %v270, %v276
          %v283 = vsub.f32 %v271, %v277
          %v284 = vsub.f32 %v272, %v278
          %v285 = vand.u32 2147483647, %v279
          %v286 = vand.u32 2147483647, %v280
          %v287 = vand.u32 2147483647, %v281
          %v288 = vand.u32 2147483647, %v282
          %v289 = vand.u32 2147483647, %v283
          %v290 = vand.u32 2147483647, %v284
          %v291 = vadd.f32 %v285, 0.0
          %v292 = vadd.f32 %v286, 0.0
          %v293 = vadd.f32 %v287, 0.0
          %v294 = vadd.f32 %v288, 0.0
          %v295 = vadd.f32 %v289, 0.0
          %v296 = vadd.f32 %v290, 0.0
          %v297 = vadd.f32 %v261, %v291
          %v298 = vadd.f32 %v262, %v292
          %v299 = vadd.f32 %v263, %v293
          %v300 = vadd.f32 %v264, %v294
          %v301 = vadd.f32 %v265, %v295
          %v302 = vadd.f32 %v266, %v296
          %303 = vst [vmem:[#allocation2] sm:$0xff] %v297
          %304 = vst [vmem:[#allocation2 + $0x8] sm:$0xff] %v298
          %305 = vst [vmem:[#allocation2 + $0x10] sm:$0xff] %v299
          %306 = vst [vmem:[#allocation2 + $0x18] sm:$0xff] %v300
          %307 = vst [vmem:[#allocation2 + $0x20] sm:$0xff] %v301
          %308 = vst [vmem:[#allocation2 + $0x28] sm:$0xff] %v302
        $region44: #{tpu_custom_call.1} parent=27 // pred_fallthru
          _
        %p309 = scmp.gt.s32.totalorder %s256, 48
        // Predicated region
        $region45: #{tpu_custom_call.1} parent=27 // pred_check
          %p310 = pneg %p309
        $region46: #{tpu_custom_call.1} parent=27 // pred_check_branch
          %312 = sbr.rel (%p310) target = $region48
        $region47: #{tpu_custom_call.1} parent=27 // pred_region
          %v313 = vld [vmem:[#allocation2] sm:$0xff]
          %v314 = vld [vmem:[#allocation2 + $0x8] sm:$0xff]
          %v315 = vld [vmem:[#allocation2 + $0x10] sm:$0xff]
          %v316 = vld [vmem:[#allocation2 + $0x18] sm:$0xff]
          %v317 = vld [vmem:[#allocation2 + $0x20] sm:$0xff]
          %v318 = vld [vmem:[#allocation2 + $0x28] sm:$0xff]
          %v319 = vld [vmem:[%s199] sm:$0xff]
          %v320 = vld [vmem:[%s199 + $0x8] sm:$0xff]
          %v321 = vld [vmem:[%s199 + $0x10] sm:$0xff]
          %v322 = vld [vmem:[%s199 + $0x18] sm:$0xff]
          %v323 = vld [vmem:[%s199 + $0x20] sm:$0xff]
          %v324 = vld [vmem:[%s199 + $0x28] sm:$0xff]
          %v325 = vld [vmem:[%s209] sm:$0xff]
          %v326 = vld [vmem:[%s209 + $0x8] sm:$0xff]
          %v327 = vld [vmem:[%s209 + $0x10] sm:$0xff]
          %v328 = vld [vmem:[%s209 + $0x18] sm:$0xff]
          %v329 = vld [vmem:[%s209 + $0x20] sm:$0xff]
          %v330 = vld [vmem:[%s209 + $0x28] sm:$0xff]
          %v331 = vsub.f32 %v319, %v325
          %v332 = vsub.f32 %v320, %v326
          %v333 = vsub.f32 %v321, %v327
          %v334 = vsub.f32 %v322, %v328
          %v335 = vsub.f32 %v323, %v329
          %v336 = vsub.f32 %v324, %v330
          %v337 = vand.u32 2147483647, %v331
          %v338 = vand.u32 2147483647, %v332
          %v339 = vand.u32 2147483647, %v333
          %v340 = vand.u32 2147483647, %v334
          %v341 = vand.u32 2147483647, %v335
          %v342 = vand.u32 2147483647, %v336
          %v343 = vlaneseq
          %v344 = vshrl.u32 %v343, 7
          %v345 = vadd.s32 %v344, 8
          %v346 = vadd.s32 %v344, 16
          %v347 = vadd.s32 %v344, 24
          %v348 = vadd.s32 %v344, 32
          %v349 = vadd.s32 %v344, 40
          %s350 = sadd.s32 %s255, 0
          %v351 = vstv %s350
          %v352 = vadd.s32 %v351, %v344
          %v353 = vadd.s32 %v351, %v345
          %v354 = vadd.s32 %v351, %v346
          %v355 = vadd.s32 %v351, %v347
          %v356 = vadd.s32 %v351, %v348
          %v357 = vadd.s32 %v351, %v349
          %vm358 = vcmp.lt.s32.totalorder %v352, 48
          %vm359 = vcmp.lt.s32.totalorder %v353, 48
          %vm360 = vcmp.lt.s32.totalorder %v354, 48
          %vm361 = vcmp.lt.s32.totalorder %v355, 48
          %vm362 = vcmp.lt.s32.totalorder %v356, 48
          %vm363 = vcmp.lt.s32.totalorder %v357, 48
          %v364 = vsel %vm358, %v337, 0.0
          %v365 = vsel %vm359, %v338, 0.0
          %v366 = vsel %vm360, %v339, 0.0
          %v367 = vsel %vm361, %v340, 0.0
          %v368 = vsel %vm362, %v341, 0.0
          %v369 = vsel %vm363, %v342, 0.0
          %v370 = vadd.f32 %v364, 0.0
          %v371 = vadd.f32 %v365, 0.0
          %v372 = vadd.f32 %v366, 0.0
          %v373 = vadd.f32 %v367, 0.0
          %v374 = vadd.f32 %v368, 0.0
          %v375 = vadd.f32 %v369, 0.0
          %v376 = vadd.f32 %v313, %v370
          %v377 = vadd.f32 %v314, %v371
          %v378 = vadd.f32 %v315, %v372
          %v379 = vadd.f32 %v316, %v373
          %v380 = vadd.f32 %v317, %v374
          %v381 = vadd.f32 %v318, %v375
          %382 = vst [vmem:[#allocation2] sm:$0xff] %v376
          %383 = vst [vmem:[#allocation2 + $0x8] sm:$0xff] %v377
          %384 = vst [vmem:[#allocation2 + $0x10] sm:$0xff] %v378
          %385 = vst [vmem:[#allocation2 + $0x18] sm:$0xff] %v379
          %386 = vst [vmem:[#allocation2 + $0x20] sm:$0xff] %v380
          %387 = vst [vmem:[#allocation2 + $0x28] sm:$0xff] %v381
        $region48: #{tpu_custom_call.1} parent=27 // pred_fallthru
          _
        // Predicated region
        $region49: #{tpu_custom_call.1} parent=27 // pred_check
          %p388 = pneg %p244
        $region50: #{tpu_custom_call.1} parent=27 // pred_check_branch
          %390 = sbr.rel (%p388) target = $region52
        $region51: #{tpu_custom_call.1} parent=27 // pred_region
          %v391 = vld [vmem:[#allocation2] sm:$0xff]
          %v392 = vld [vmem:[#allocation2 + $0x8] sm:$0xff]
          %v393 = vld [vmem:[#allocation2 + $0x10] sm:$0xff]
          %v394 = vld [vmem:[#allocation2 + $0x18] sm:$0xff]
          %v395 = vld [vmem:[#allocation2 + $0x20] sm:$0xff]
          %v396 = vld [vmem:[#allocation2 + $0x28] sm:$0xff]
          %v397 = vlaneseq
          %v398 = vshrl.u32 %v397, 7
          %v399 = vadd.s32 %v398, 8
          %v400 = vadd.s32 %v398, 16
          %v401 = vadd.s32 %v398, 24
          %v402 = vadd.s32 %v398, 32
          %v403 = vadd.s32 %v398, 40
          %v404 = vlaneseq
          %v405 = vand.u32 %v404, 127
          %v406 = vmul.u32 %v398, 128
          %v407 = vmul.u32 %v399, 128
          %v408 = vmul.u32 %v400, 128
          %v409 = vmul.u32 %v401, 128
          %v410 = vmul.u32 %v402, 128
          %v411 = vmul.u32 %v403, 128
          %v412 = vadd.s32 %v406, %v405
          %v413 = vadd.s32 %v407, %v405
          %v414 = vadd.s32 %v408, %v405
          %v415 = vadd.s32 %v409, %v405
          %v416 = vadd.s32 %v410, %v405
          %v417 = vadd.s32 %v411, %v405
          %vm418 = vcmp.lt.s32.totalorder %v412, 0
          %v419 = vsub.s32 0, %v412
          %v420 = vsel %vm418, %v419, %v412
          %v421 = vand.u32 %v420, 65535
          %v422 = vshrl.u32 %v420, 16
          %v424 = vmul.u32 %v421, 43691
          %v425 = vmul.u32 %v421, 43690
          %v426 = vmul.u32 %v422, 43691
          %v427 = vmul.u32 %v422, 43690
          %v428 = vshll.u32 %v425, 16
          %v429 = vshrl.u32 %v425, 16
          %v430 = vshll.u32 %v426, 16
          %v431 = vshrl.u32 %v426, 16
          %vm432 = vc.u32 %v424, %v428
          %v433 = vsel %vm432, 1, 0
          %v434 = vadd.s32 %v424, %v428
          %v435 = vadd.s32 %v427, %v433
          %vm436 = vc.u32 %v434, %v430
          %v437 = vsel %vm436, 1, 0
          %v438 = vadd.s32 %v434, %v430
          %v439 = vadd.s32 %v435, %v437
          %v440 = vadd.s32 %v439, %v429
          %v441 = vadd.s32 %v440, %v431
          %v442 = vshrl.u32 %v441, 2
          %v443 = vmul.u32 %v442, 6
          %v444 = vsub.s32 %v420, %v443
          %v445 = vsub.s32 0, %v444
          %v446 = vsel %vm418, %v445, %v444
          %vm447 = vcmp.lt.s32.totalorder %v413, 0
          %v448 = vsub.s32 0, %v413
          %v449 = vsel %vm447, %v448, %v413
          %v450 = vand.u32 %v449, 65535
          %v451 = vshrl.u32 %v449, 16
          %v453 = vmul.u32 %v450, 43691
          %v454 = vmul.u32 %v450, 43690
          %v455 = vmul.u32 %v451, 43691
          %v456 = vmul.u32 %v451, 43690
          %v457 = vshll.u32 %v454, 16
          %v458 = vshrl.u32 %v454, 16
          %v459 = vshll.u32 %v455, 16
          %v460 = vshrl.u32 %v455, 16
          %vm461 = vc.u32 %v453, %v457
          %v462 = vsel %vm461, 1, 0
          %v463 = vadd.s32 %v453, %v457
          %v464 = vadd.s32 %v456, %v462
          %vm465 = vc.u32 %v463, %v459
          %v466 = vsel %vm465, 1, 0
          %v467 = vadd.s32 %v463, %v459
          %v468 = vadd.s32 %v464, %v466
          %v469 = vadd.s32 %v468, %v458
          %v470 = vadd.s32 %v469, %v460
          %v471 = vshrl.u32 %v470, 2
          %v472 = vmul.u32 %v471, 6
          %v473 = vsub.s32 %v449, %v472
          %v474 = vsub.s32 0, %v473
          %v475 = vsel %vm447, %v474, %v473
          %vm476 = vcmp.lt.s32.totalorder %v414, 0
          %v477 = vsub.s32 0, %v414
          %v478 = vsel %vm476, %v477, %v414
          %v479 = vand.u32 %v478, 65535
          %v480 = vshrl.u32 %v478, 16
          %v482 = vmul.u32 %v479, 43691
          %v483 = vmul.u32 %v479, 43690
          %v484 = vmul.u32 %v480, 43691
          %v485 = vmul.u32 %v480, 43690
          %v486 = vshll.u32 %v483, 16
          %v487 = vshrl.u32 %v483, 16
          %v488 = vshll.u32 %v484, 16
          %v489 = vshrl.u32 %v484, 16
          %vm490 = vc.u32 %v482, %v486
          %v491 = vsel %vm490, 1, 0
          %v492 = vadd.s32 %v482, %v486
          %v493 = vadd.s32 %v485, %v491
          %vm494 = vc.u32 %v492, %v488
          %v495 = vsel %vm494, 1, 0
          %v496 = vadd.s32 %v492, %v488
          %v497 = vadd.s32 %v493, %v495
          %v498 = vadd.s32 %v497, %v487
          %v499 = vadd.s32 %v498, %v489
          %v500 = vshrl.u32 %v499, 2
          %v501 = vmul.u32 %v500, 6
          %v502 = vsub.s32 %v478, %v501
          %v503 = vsub.s32 0, %v502
          %v504 = vsel %vm476, %v503, %v502
          %vm505 = vcmp.lt.s32.totalorder %v415, 0
          %v506 = vsub.s32 0, %v415
          %v507 = vsel %vm505, %v506, %v415
          %v508 = vand.u32 %v507, 65535
          %v509 = vshrl.u32 %v507, 16
          %v511 = vmul.u32 %v508, 43691
          %v512 = vmul.u32 %v508, 43690
          %v513 = vmul.u32 %v509, 43691
          %v514 = vmul.u32 %v509, 43690
          %v515 = vshll.u32 %v512, 16
          %v516 = vshrl.u32 %v512, 16
          %v517 = vshll.u32 %v513, 16
          %v518 = vshrl.u32 %v513, 16
          %vm519 = vc.u32 %v511, %v515
          %v520 = vsel %vm519, 1, 0
          %v521 = vadd.s32 %v511, %v515
          %v522 = vadd.s32 %v514, %v520
          %vm523 = vc.u32 %v521, %v517
          %v524 = vsel %vm523, 1, 0
          %v525 = vadd.s32 %v521, %v517
          %v526 = vadd.s32 %v522, %v524
          %v527 = vadd.s32 %v526, %v516
          %v528 = vadd.s32 %v527, %v518
          %v529 = vshrl.u32 %v528, 2
          %v530 = vmul.u32 %v529, 6
          %v531 = vsub.s32 %v507, %v530
          %v532 = vsub.s32 0, %v531
          %v533 = vsel %vm505, %v532, %v531
          %vm534 = vcmp.lt.s32.totalorder %v416, 0
          %v535 = vsub.s32 0, %v416
          %v536 = vsel %vm534, %v535, %v416
          %v537 = vand.u32 %v536, 65535
          %v538 = vshrl.u32 %v536, 16
          %v540 = vmul.u32 %v537, 43691
          %v541 = vmul.u32 %v537, 43690
          %v542 = vmul.u32 %v538, 43691
          %v543 = vmul.u32 %v538, 43690
          %v544 = vshll.u32 %v541, 16
          %v545 = vshrl.u32 %v541, 16
          %v546 = vshll.u32 %v542, 16
          %v547 = vshrl.u32 %v542, 16
          %vm548 = vc.u32 %v540, %v544
          %v549 = vsel %vm548, 1, 0
          %v550 = vadd.s32 %v540, %v544
          %v551 = vadd.s32 %v543, %v549
          %vm552 = vc.u32 %v550, %v546
          %v553 = vsel %vm552, 1, 0
          %v554 = vadd.s32 %v550, %v546
          %v555 = vadd.s32 %v551, %v553
          %v556 = vadd.s32 %v555, %v545
          %v557 = vadd.s32 %v556, %v547
          %v558 = vshrl.u32 %v557, 2
          %v559 = vmul.u32 %v558, 6
          %v560 = vsub.s32 %v536, %v559
          %v561 = vsub.s32 0, %v560
          %v562 = vsel %vm534, %v561, %v560
          %vm563 = vcmp.lt.s32.totalorder %v417, 0
          %v564 = vsub.s32 0, %v417
          %v565 = vsel %vm563, %v564, %v417
          %v566 = vand.u32 %v565, 65535
          %v567 = vshrl.u32 %v565, 16
          %v569 = vmul.u32 %v566, 43691
          %v570 = vmul.u32 %v566, 43690
          %v571 = vmul.u32 %v567, 43691
          %v572 = vmul.u32 %v567, 43690
          %v573 = vshll.u32 %v570, 16
          %v574 = vshrl.u32 %v570, 16
          %v575 = vshll.u32 %v571, 16
          %v576 = vshrl.u32 %v571, 16
          %vm577 = vc.u32 %v569, %v573
          %v578 = vsel %vm577, 1, 0
          %v579 = vadd.s32 %v569, %v573
          %v580 = vadd.s32 %v572, %v578
          %vm581 = vc.u32 %v579, %v575
          %v582 = vsel %vm581, 1, 0
          %v583 = vadd.s32 %v579, %v575
          %v584 = vadd.s32 %v580, %v582
          %v585 = vadd.s32 %v584, %v574
          %v586 = vadd.s32 %v585, %v576
          %v587 = vshrl.u32 %v586, 2
          %v588 = vmul.u32 %v587, 6
          %v589 = vsub.s32 %v565, %v588
          %v590 = vsub.s32 0, %v589
          %v591 = vsel %vm563, %v590, %v589
          %vm592 = vcmp.ne.s32.totalorder %v446, 0
          %vm593 = vcmp.ne.s32.totalorder %v475, 0
          %vm594 = vcmp.ne.s32.totalorder %v504, 0
          %vm595 = vcmp.ne.s32.totalorder %v533, 0
          %vm596 = vcmp.ne.s32.totalorder %v562, 0
          %vm597 = vcmp.ne.s32.totalorder %v591, 0
          %vm598 = vcmp.lt.s32.totalorder %v446, 0
          %vm599 = vcmp.lt.s32.totalorder %v475, 0
          %vm600 = vcmp.lt.s32.totalorder %v504, 0
          %vm601 = vcmp.lt.s32.totalorder %v533, 0
          %vm602 = vcmp.lt.s32.totalorder %v562, 0
          %vm603 = vcmp.lt.s32.totalorder %v591, 0
          %vm604 = vmand %vm598, %vm592
          %vm605 = vmand %vm599, %vm593
          %vm606 = vmand %vm600, %vm594
          %vm607 = vmand %vm601, %vm595
          %vm608 = vmand %vm602, %vm596
          %vm609 = vmand %vm603, %vm597
          %v610 = vadd.s32 %v446, 6
          %v611 = vadd.s32 %v475, 6
          %v612 = vadd.s32 %v504, 6
          %v613 = vadd.s32 %v533, 6
          %v614 = vadd.s32 %v562, 6
          %v615 = vadd.s32 %v591, 6
          %v616 = vsel %vm604, %v610, %v446
          %v617 = vsel %vm605, %v611, %v475
          %v618 = vsel %vm606, %v612, %v504
          %v619 = vsel %vm607, %v613, %v533
          %v620 = vsel %vm608, %v614, %v562
          %v621 = vsel %vm609, %v615, %v591
          %vm622 = vcmp.lt.s32.totalorder %v616, 3
          %vm623 = vcmp.lt.s32.totalorder %v617, 3
          %vm624 = vcmp.lt.s32.totalorder %v618, 3
          %vm625 = vcmp.lt.s32.totalorder %v619, 3
          %vm626 = vcmp.lt.s32.totalorder %v620, 3
          %vm627 = vcmp.lt.s32.totalorder %v621, 3
          %v628 = vsel %vm622, %v391, 0.0
          %v629 = vsel %vm623, %v392, 0.0
          %v630 = vsel %vm624, %v393, 0.0
          %v631 = vsel %vm625, %v394, 0.0
          %v632 = vsel %vm626, %v395, 0.0
          %v633 = vsel %vm627, %v396, 0.0
          %v634 = vadd.f32 %v628, %v629
          %v635 = vadd.f32 %v634, %v630
          %v636 = vadd.f32 %v635, %v631
          %v637 = vadd.f32 %v636, %v632
          %v638 = vadd.f32 %v637, %v633
          %639 = vadd.xlane.f32.xlu0 %v638
          %v640 = vpop.xlane.xlu0 %639
          %v641 = vrot.slane %v640, 4
          %v642 = vadd.f32 %v640, %v641
          %v643 = vrot.slane %v642, 2
          %v644 = vadd.f32 %v642, %v643
          %v645 = vrot.slane %v644, 1
          %v646 = vadd.f32 %v644, %v645
          %s647 = vtos %v646
          %v648 = vadd.f32 %v391, %v392
          %v649 = vadd.f32 %v648, %v393
          %v650 = vadd.f32 %v649, %v394
          %v651 = vadd.f32 %v650, %v395
          %v652 = vadd.f32 %v651, %v396
          %653 = vadd.xlane.f32.xlu0 %v652
          %v654 = vpop.xlane.xlu0 %653
          %v655 = vrot.slane %v654, 4
          %v656 = vadd.f32 %v654, %v655
          %v657 = vrot.slane %v656, 2
          %v658 = vadd.f32 %v656, %v657
          %v659 = vrot.slane %v658, 1
          %v660 = vadd.f32 %v658, %v659
          %s661 = vtos %v660
          %s662 = ssub.f32 %s661, %s647
          %vm663 = vcmp.eq.s32.totalorder %v398, 0
          %s664 = smul.f32 %s647, 0.041666668
          %vm665 = vcmp.eq.s32.totalorder %v398, 1
          %s666 = smul.f32 %s662, 0.041666668
          %v667 = vstv %s666
          %v668 = vsel %vm665, %v667, 0.0
          %v669 = vstv %s664
          %v670 = vsel %vm663, %v669, %v668
          %671 = vst [vmem:[%s235] sm:$0xff] %v670
        $region52: #{tpu_custom_call.1} parent=27 // pred_fallthru
          _
        %s672 = sand.u32 %s106, 1
        %s673 = scalar_lea.sflag [#allocation5], %s672
        %s674 = sand.u32 %s106, 1
        %s675 = smul.addr %s674, 8
        %s676 = scalar_lea.vmem [#allocation8], %s675
        // Predicated region
        $region53: #{tpu_custom_call.1} parent=27 // pred_check
          %p677 = pneg %p116
        $region54: #{tpu_custom_call.1} parent=27 // pred_check_branch
          %679 = sbr.rel (%p677) target = $region56
        $region55: #{tpu_custom_call.1} parent=27 // pred_region
          %681 = vsyncadd %s673, 0
          %s682 = smul.addr %s26, 8
          %s683 = scalar_lea.hbm %s2, %s682
          %s685 = sshll.u32 %s676, 4
          %s686 = int_to_ptr.vmem [resolvable:$true] %s685
          %s687 = sshll.u32 %s683, 4
          %s688 = int_to_ptr.hbm [resolvable:$true] %s687
          %690 = dma.vmem_to_hbm [thread:$0]  %s686, 128, %s688, %s673
        $region56: #{tpu_custom_call.1} parent=27 // pred_fallthru
          _
      $region28: #{tpu_custom_call.1} parent=5 // pred_fallthru
        _
      %p691 = scmp.le.s32.totalorder 2, %s17
      // Predicated region
      $region57: #{tpu_custom_call.1} parent=5 // pred_check
        %p692 = pneg %p691
      $region58: #{tpu_custom_call.1} parent=5 // pred_check_branch
        %694 = sbr.rel (%p692) target = $region60
      $region59: #{tpu_custom_call.1} parent=5 // pred_region
        %s695 = ssub.s32 %s17, 2
        // Predicated region
        $region61: #{tpu_custom_call.1} parent=59 // pred_check
          %p696 = pneg %p122
        $region62: #{tpu_custom_call.1} parent=59 // pred_check_branch
          %698 = sbr.rel (%p696) target = $region64
        $region63: #{tpu_custom_call.1} parent=59 // pred_region
          %s699 = sand.u32 %s107, 1
          %s700 = scalar_lea.sflag [#allocation5], %s699
          %s701 = sand.u32 %s107, 1
          %s702 = smul.addr %s701, 8
          %s703 = scalar_lea.vmem [#allocation8], %s702
          %705 = dma.done %s700, 128
        $region64: #{tpu_custom_call.1} parent=59 // pred_fallthru
          _
      $region60: #{tpu_custom_call.1} parent=5 // pred_fallthru
        _
    $region6: #{tpu_custom_call.1} parent=1 // loop_footer
      %s21 = sadd.s32 1, %s17
    $region7: #{tpu_custom_call.1} parent=1 // loop_footer_branch
      %16 = sbr.rel target = $region3
    $region8: #{tpu_custom_call.1} parent=1 // loop_exit
      _
    %706 = vsyncpa [#allocation4], 1
    %s707 = scalar_lea.sflag [#allocation4], 1
    %708 = vsyncpa %s707, 1
    %709 = vsyncpa [#allocation7], 1
    %s710 = scalar_lea.sflag [#allocation7], 1
    %711 = vsyncpa %s710, 1
    %712 = vsyncpa [#allocation5], 1
    %s713 = scalar_lea.sflag [#allocation5], 1
    %714 = vsyncpa %s713, 1

</llo_original>
